<compile_context>
chip_gen: v5e
topology: v5e:2x2
jax: 0.10.0
libtpu: 0.0.40
codegen_flags: <defaults>
</compile_context>

<pallas_src>
import functools

import jax
import jax.numpy as jnp
from jax.experimental import pallas as pl
from jax.experimental.pallas import tpu as pltpu

EPS = 1e-5
ROWS, LANES = 8, 128
N_PAD = ROWS * LANES  # 1024 examples per single-block call


def _make_kernel(n, measure):
    """Kernel factory; `n` (valid example count) and `measure` are static."""

    def kernel(packed_ref, out_ref):
        # packed_ref: (3, 8, 128) f32 -> [logits, targets, male_mask]
        logits = packed_ref[0]
        t = packed_ref[1]          # zero at padded slots
        m = packed_ref[2]          # zero at padded slots

        # Elementwise hot path (EUP sigmoid, VPU mul/sub).
        p = jnp.clip(jax.nn.sigmoid(logits), EPS, 1.0 - EPS)
        one_m_p = 1.0 - p
        nt = 1.0 - t

        # Static validity mask built in-kernel (n is a trace-time constant,
        # so no extra HBM buffer / DMA is needed for the female group).
        row = jax.lax.broadcasted_iota(jnp.int32, (ROWS, LANES), 0)
        col = jax.lax.broadcasted_iota(jnp.int32, (ROWS, LANES), 1)
        v = ((row * LANES + col) < n).astype(jnp.float32)

        if measure == "dp":
            # demographic parity
            tiles = (m * p,          # male prob mass
                     v * p,          # total prob mass (valid rows only)
                     m)              # male count
        else:
            # equalized odds ('eo'; also the PyTorch fallback for any other
            # measure).  Female sums are complements of the totals.
            mt = m * t               # male positives
            mnt = m * nt             # male negatives
            vnt = v * nt             # all valid negatives
            tiles = (mt * one_m_p,   # male FNR numerator
                     t * one_m_p,    # total FNR numerator
                     mnt * p,        # male FPR numerator
                     vnt * p,        # total FPR numerator
                     mt,             # male positives
                     t,              # total positives
                     mnt,            # male negatives
                     vnt)            # total negatives

        # Fused reduction: one stacked array, two trailing-axis sums
        # (instead of K independent full reductions).
        stacked = jnp.stack(tiles)                              # (K, 8, 128)
        lane_sums = jnp.sum(stacked, axis=-1)                   # (K, 8)
        sums = jnp.sum(lane_sums, axis=-1, keepdims=True)       # (K, 1)

        if measure == "dp":
            male_mask_sum = sums[2, 0] + EPS
            female_mask_sum = (float(n) - sums[2, 0]) + EPS
            male_p = sums[0, 0] / male_mask_sum
            female_p = (sums[1, 0] - sums[0, 0]) / female_mask_sum
            demp = jnp.abs(male_p - female_p)
            out_ref[0] = -jnp.abs(demp)
        else:
            # No epsilon on these denominators (matches the reference):
            # a group with zero positives/negatives produces NaN/Inf.
            male_fnr = sums[0, 0] / sums[4, 0]
            female_fnr = (sums[1, 0] - sums[0, 0]) / (sums[5, 0] - sums[4, 0])
            male_fpr = sums[2, 0] / sums[6, 0]
            female_fpr = (sums[3, 0] - sums[2, 0]) / (sums[7, 0] - sums[6, 0])
            eo = jnp.maximum(jnp.abs(male_fnr - female_fnr),
                             jnp.abs(male_fpr - female_fpr))
            # eo >= 0 already; abs kept only for literal fidelity with
            # `loss = -torch.abs(eo)` in the PyTorch reference.
            out_ref[0] = -jnp.abs(eo)

    return kernel


@functools.partial(jax.jit, static_argnames=("measure",))
def disparate_impact_maximizer_loss(logits, targets, sensitive_feature,
                                    measure="eo"):
    """JAX/Pallas equivalent of DisparateImpactMaximizerLoss.forward.

    logits: (N,) or (N, 1) float; targets: (N,) {0., 1.};
    sensitive_feature: (N,), elements equal to 1 mark the 'male' group.
    Returns a scalar float32 loss (-|eo| for 'eo'/default, -|dp| for 'dp').
    """
    logits = jnp.squeeze(jnp.asarray(logits, jnp.float32))
    targets = jnp.asarray(targets, jnp.float32).reshape(-1)
    male = (jnp.asarray(sensitive_feature) == 1).astype(jnp.float32).reshape(-1)

    n = int(logits.shape[0])
    assert n <= N_PAD, "single-block kernel handles N <= 1024"
    # TODO(synk): for N > 1024, add a grid over the example axis
    # (dimension_semantics=("parallel",)) and combine per-block partial sums.

    # One static pad + reshape for all three vectors, packed into a single
    # VMEM block -> exactly one HBM->VMEM DMA for the kernel.
    flat = jnp.stack([logits, targets, male], axis=0)                 # (3, n)
    packed = jnp.pad(flat, ((0, 0), (0, N_PAD - n))).reshape(3, ROWS, LANES)

    out = pl.pallas_call(
        _make_kernel(n, measure),
        out_shape=jax.ShapeDtypeStruct((1,), jnp.float32),
        in_specs=[pl.BlockSpec(memory_space=pltpu.VMEM)],
        out_specs=pl.BlockSpec(memory_space=pltpu.SMEM),
    )(packed)
    # TODO(synk): if a custom VJP or both measures at once are ever needed,
    # also return the (K,) group sums as a second SMEM output instead of
    # re-running the kernel.
    return out[0]


def _reference_eo(logits, targets, sensitive):
    """Plain-JAX port of the PyTorch forward (measure='eo')."""
    logits = jnp.squeeze(jnp.asarray(logits, jnp.float32))
    t = jnp.asarray(targets, jnp.float32).reshape(-1)
    m = (jnp.asarray(sensitive) == 1).astype(jnp.float32).reshape(-1)
    f = 1.0 - m
    p = jnp.clip(jax.nn.sigmoid(logits), EPS, 1.0 - EPS)
    male_fnr = jnp.sum(m * (1 - p) * t) / jnp.sum(m * t)
    female_fnr = jnp.sum(f * (1 - p) * t) / jnp.sum(f * t)
    male_fpr = jnp.sum(m * p * (1 - t)) / jnp.sum(m * (1 - t))
    female_fpr = jnp.sum(f * p * (1 - t)) / jnp.sum(f * (1 - t))
    eo = jnp.maximum(jnp.abs(male_fnr - female_fnr),
                     jnp.abs(male_fpr - female_fpr))
    return -jnp.abs(eo)


def _reference_dp(logits, sensitive):
    """Plain-JAX port of the PyTorch forward (measure='dp')."""
    logits = jnp.squeeze(jnp.asarray(logits, jnp.float32))
    m = (jnp.asarray(sensitive) == 1).astype(jnp.float32).reshape(-1)
    f = 1.0 - m
    p = jnp.clip(jax.nn.sigmoid(logits), EPS, 1.0 - EPS)
    male_p = jnp.sum(m * p) / (jnp.sum(m) + EPS)
    female_p = jnp.sum(f * p) / (jnp.sum(f) + EPS)
    return -jnp.abs(jnp.abs(male_p - female_p))


if __name__ == "__main__":
    key = jax.random.PRNGKey(0)
    k1, k2, k3 = jax.random.split(key, 3)

    N = 200
    logits = jax.random.normal(k1, (N, 1), jnp.float32)          # squeezed in fwd
    targets = (jax.random.uniform(k2, (N,)) > 0.5).astype(jnp.float32)
    sensitive = (jax.random.uniform(k3, (N,)) > 0.5).astype(jnp.int32)

    # measure='eo' (default)
    loss_eo = jax.block_until_ready(
        disparate_impact_maximizer_loss(logits, targets, sensitive))
    ref_eo = _reference_eo(logits, targets, sensitive)
    assert bool(jnp.isfinite(loss_eo)), loss_eo
    assert jnp.allclose(loss_eo, ref_eo, atol=2e-5, rtol=1e-4), (loss_eo, ref_eo)

    # measure='dp'
    loss_dp = jax.block_until_ready(
        disparate_impact_maximizer_loss(logits, targets, sensitive,
                                        measure="dp"))
    ref_dp = _reference_dp(logits, sensitive)
    assert bool(jnp.isfinite(loss_dp)), loss_dp
    assert jnp.allclose(loss_dp, ref_dp, atol=2e-5, rtol=1e-4), (loss_dp, ref_dp)

    print("KERNEL_OK")
</pallas_src>

<mosaic_0001>
module attributes {stable_mosaic.version = 11 : i64} {
  func.func @kernel(%arg0: memref<3x8x128xf32, #tpu.memory_space<vmem>>, %arg1: memref<1xf32, #tpu.memory_space<smem>>) attributes {dimension_semantics = [], scalar_prefetch = 0 : i64, scratch_operands = 0 : i64, tpu.core_type = #tpu.core_type<tc>} {
    %c0 = arith.constant 0 : index
    %c0_0 = arith.constant 0 : index
    %c0_1 = arith.constant 0 : index
    %0 = vector.load %arg0[%c0, %c0_0, %c0_1] : memref<3x8x128xf32, #tpu.memory_space<vmem>>, vector<1x8x128xf32>
    %1 = vector.shape_cast %0 : vector<1x8x128xf32> to vector<8x128xf32>
    %c1 = arith.constant 1 : index
    %c0_2 = arith.constant 0 : index
    %c0_3 = arith.constant 0 : index
    %2 = vector.load %arg0[%c1, %c0_2, %c0_3] : memref<3x8x128xf32, #tpu.memory_space<vmem>>, vector<1x8x128xf32>
    %3 = vector.shape_cast %2 : vector<1x8x128xf32> to vector<8x128xf32>
    %c2 = arith.constant 2 : index
    %c0_4 = arith.constant 0 : index
    %c0_5 = arith.constant 0 : index
    %4 = vector.load %arg0[%c2, %c0_4, %c0_5] : memref<3x8x128xf32, #tpu.memory_space<vmem>>, vector<1x8x128xf32>
    %5 = vector.shape_cast %4 : vector<1x8x128xf32> to vector<8x128xf32>
    %6 = arith.negf %1 : vector<8x128xf32>
    %7 = math.exp %6 : vector<8x128xf32>
    %cst = arith.constant 1.000000e+00 : f32
    %8 = vector.broadcast %cst : f32 to vector<8x128xf32>
    %9 = arith.addf %8, %7 : vector<8x128xf32>
    %10 = arith.divf %8, %9 : vector<8x128xf32>
    %cst_6 = arith.constant 9.99999974E-6 : f32
    %cst_7 = arith.constant 0.999989986 : f32
    %11 = vector.broadcast %cst_6 : f32 to vector<8x128xf32>
    %12 = arith.maximumf %11, %10 : vector<8x128xf32>
    %13 = vector.broadcast %cst_7 : f32 to vector<8x128xf32>
    %14 = arith.minimumf %13, %12 : vector<8x128xf32>
    %cst_8 = arith.constant 1.000000e+00 : f32
    %15 = vector.broadcast %cst_8 : f32 to vector<8x128xf32>
    %16 = arith.subf %15, %14 : vector<8x128xf32>
    %cst_9 = arith.constant 1.000000e+00 : f32
    %17 = vector.broadcast %cst_9 : f32 to vector<8x128xf32>
    %18 = arith.subf %17, %3 : vector<8x128xf32>
    %19 = tpu.iota {dimensions = array<i32: 0>} : vector<8x128xi32>
    %20 = tpu.iota {dimensions = array<i32: 1>} : vector<8x128xi32>
    %c128_i32 = arith.constant 128 : i32
    %21 = vector.broadcast %c128_i32 : i32 to vector<8x128xi32>
    %22 = arith.muli %19, %21 : vector<8x128xi32>
    %23 = arith.addi %22, %20 : vector<8x128xi32>
    %c200_i32 = arith.constant 200 : i32
    %24 = vector.broadcast %c200_i32 : i32 to vector<8x128xi32>
    %25 = arith.cmpi slt, %23, %24 : vector<8x128xi32>
    %26 = arith.extui %25 : vector<8x128xi1> to vector<8x128xi32>
    %27 = arith.sitofp %26 : vector<8x128xi32> to vector<8x128xf32>
    %28 = arith.mulf %5, %3 : vector<8x128xf32>
    %29 = arith.mulf %5, %18 : vector<8x128xf32>
    %30 = arith.mulf %27, %18 : vector<8x128xf32>
    %31 = arith.mulf %28, %16 : vector<8x128xf32>
    %32 = arith.mulf %3, %16 : vector<8x128xf32>
    %33 = arith.mulf %29, %14 : vector<8x128xf32>
    %34 = arith.mulf %30, %14 : vector<8x128xf32>
    %35 = vector.shape_cast %31 : vector<8x128xf32> to vector<1x8x128xf32>
    %36 = vector.shape_cast %32 : vector<8x128xf32> to vector<1x8x128xf32>
    %37 = vector.shape_cast %33 : vector<8x128xf32> to vector<1x8x128xf32>
    %38 = vector.shape_cast %34 : vector<8x128xf32> to vector<1x8x128xf32>
    %39 = vector.shape_cast %28 : vector<8x128xf32> to vector<1x8x128xf32>
    %40 = vector.shape_cast %3 : vector<8x128xf32> to vector<1x8x128xf32>
    %41 = vector.shape_cast %29 : vector<8x128xf32> to vector<1x8x128xf32>
    %42 = vector.shape_cast %30 : vector<8x128xf32> to vector<1x8x128xf32>
    %43 = tpu.concatenate %35, %36, %37, %38, %39, %40, %41, %42 in 0 : vector<1x8x128xf32>, vector<1x8x128xf32>, vector<1x8x128xf32>, vector<1x8x128xf32>, vector<1x8x128xf32>, vector<1x8x128xf32>, vector<1x8x128xf32>, vector<1x8x128xf32> -> vector<8x8x128xf32>
    %cst_10 = arith.constant dense<0.000000e+00> : vector<8x8xf32>
    %44 = vector.multi_reduction <add>, %43, %cst_10 [2] : vector<8x8x128xf32> to vector<8x8xf32>
    %cst_11 = arith.constant dense<0.000000e+00> : vector<8xf32>
    %45 = vector.multi_reduction <add>, %44, %cst_11 [1] : vector<8x8xf32> to vector<8xf32>
    %46 = vector.shape_cast %45 : vector<8xf32> to vector<8x1xf32>
    %47 = vector.extract_strided_slice %46 {offsets = [0, 0], sizes = [1, 1], strides = [1, 1]} : vector<8x1xf32> to vector<1x1xf32>
    %48 = vector.extract %47[0, 0] : f32 from vector<1x1xf32>
    %49 = vector.extract_strided_slice %46 {offsets = [4, 0], sizes = [1, 1], strides = [1, 1]} : vector<8x1xf32> to vector<1x1xf32>
    %50 = vector.extract %49[0, 0] : f32 from vector<1x1xf32>
    %51 = arith.divf %48, %50 : f32
    %52 = vector.extract_strided_slice %46 {offsets = [1, 0], sizes = [1, 1], strides = [1, 1]} : vector<8x1xf32> to vector<1x1xf32>
    %53 = vector.extract %52[0, 0] : f32 from vector<1x1xf32>
    %54 = vector.extract_strided_slice %46 {offsets = [0, 0], sizes = [1, 1], strides = [1, 1]} : vector<8x1xf32> to vector<1x1xf32>
    %55 = vector.extract %54[0, 0] : f32 from vector<1x1xf32>
    %56 = arith.subf %53, %55 : f32
    %57 = vector.extract_strided_slice %46 {offsets = [5, 0], sizes = [1, 1], strides = [1, 1]} : vector<8x1xf32> to vector<1x1xf32>
    %58 = vector.extract %57[0, 0] : f32 from vector<1x1xf32>
    %59 = vector.extract_strided_slice %46 {offsets = [4, 0], sizes = [1, 1], strides = [1, 1]} : vector<8x1xf32> to vector<1x1xf32>
    %60 = vector.extract %59[0, 0] : f32 from vector<1x1xf32>
    %61 = arith.subf %58, %60 : f32
    %62 = arith.divf %56, %61 : f32
    %63 = vector.extract_strided_slice %46 {offsets = [2, 0], sizes = [1, 1], strides = [1, 1]} : vector<8x1xf32> to vector<1x1xf32>
    %64 = vector.extract %63[0, 0] : f32 from vector<1x1xf32>
    %65 = vector.extract_strided_slice %46 {offsets = [6, 0], sizes = [1, 1], strides = [1, 1]} : vector<8x1xf32> to vector<1x1xf32>
    %66 = vector.extract %65[0, 0] : f32 from vector<1x1xf32>
    %67 = arith.divf %64, %66 : f32
    %68 = vector.extract_strided_slice %46 {offsets = [3, 0], sizes = [1, 1], strides = [1, 1]} : vector<8x1xf32> to vector<1x1xf32>
    %69 = vector.extract %68[0, 0] : f32 from vector<1x1xf32>
    %70 = vector.extract_strided_slice %46 {offsets = [2, 0], sizes = [1, 1], strides = [1, 1]} : vector<8x1xf32> to vector<1x1xf32>
    %71 = vector.extract %70[0, 0] : f32 from vector<1x1xf32>
    %72 = arith.subf %69, %71 : f32
    %73 = vector.extract_strided_slice %46 {offsets = [7, 0], sizes = [1, 1], strides = [1, 1]} : vector<8x1xf32> to vector<1x1xf32>
    %74 = vector.extract %73[0, 0] : f32 from vector<1x1xf32>
    %75 = vector.extract_strided_slice %46 {offsets = [6, 0], sizes = [1, 1], strides = [1, 1]} : vector<8x1xf32> to vector<1x1xf32>
    %76 = vector.extract %75[0, 0] : f32 from vector<1x1xf32>
    %77 = arith.subf %74, %76 : f32
    %78 = arith.divf %72, %77 : f32
    %79 = arith.subf %51, %62 : f32
    %80 = math.absf %79 : f32
    %81 = arith.subf %67, %78 : f32
    %82 = math.absf %81 : f32
    %83 = arith.maximumf %80, %82 : f32
    %84 = math.absf %83 : f32
    %cst_12 = arith.constant 0.000000e+00 : f32
    %85 = arith.subf %cst_12, %84 : f32
    %c0_13 = arith.constant 0 : index
    %86 = memref.load %arg1[%c0_13] : memref<1xf32, #tpu.memory_space<smem>>
    memref.store %85, %arg1[%c0_13] : memref<1xf32, #tpu.memory_space<smem>>
    return
  }
}

</mosaic_0001>

<llo_original>
// kernel: disparate_impact_maximizer_loss.1
$region0: #{disparate_impact_maximizer_loss.1}
  #allocation0 [shape = 'u32[]', space=smem, size = 0x4, offset = 0x4, fixed_abs, tag = 'smem constant byte address 0x4 - core index']
  #allocation1 [shape = 'u32[72,128]{1,0:T(1,128)}', space=vmem, size = 0x9000, scoped, tag = 'internal scratch']
  %s0 = inlined_call_operand.vmem [shape: f32[3,8,128], index: 0, kind: input, shape index: {}]
  %s1 = inlined_call_operand.hbm [shape: f32[1], index: 1, kind: output, shape index: {}]
  %s2 = sld [smem:[#allocation0]]
  $region14: #{disparate_impact_maximizer_loss.1} parent=0
    _
  %s4 = ssub.s32 1, %s2
  %s5 = scalar_select 0, %s4, %s2
  $region1: #{disparate_impact_maximizer_loss.1} parent=0
    #allocation2 [shape = 'u8[512]{0}', space=smem, size = 0x200, scoped, tag = 'output window, operand 0, single buffered']
    #allocation3 [shape = 's32[1]{0}', space=sflag, size = 0x4, scoped, tag = 'scoped memory for disparate_impact_maximizer_loss.1']
    %6 = vsyncpa [#allocation3], 0
    // Predicated region
    $region2: #{disparate_impact_maximizer_loss.1} parent=1 // pred_check
      _
    $region3: #{disparate_impact_maximizer_loss.1} parent=1 // pred_check_branch
      %8 = sbr.rel (0) target = $region5
    $region4: #{disparate_impact_maximizer_loss.1} parent=1 // pred_region
      _
    $region5: #{disparate_impact_maximizer_loss.1} parent=1 // pred_fallthru
      _
    %v9 = vld [vmem:[%s0] sm:$0xff]
    %s10 = scalar_lea.vmem %s0, 8
    %v11 = vld [vmem:[%s10] sm:$0xff]
    %s12 = scalar_lea.vmem %s0, 16
    %v13 = vld [vmem:[%s12] sm:$0xff]
    %v14 = vxor.u32 %v9, 2147483648
    %v15 = vmul.f32 %v14, 1.442695
    %v16 = vpow.pop %v15
    %v17 = vadd.f32 %v16, 1.0
    %v18 = vrcp.pop %v17
    %v19 = vmul.f32 %v17, %v18
    %v20 = vsub.f32 1.0, %v19
    %v21 = vmul.f32 %v18, %v20
    %v22 = vadd.f32 %v18, %v21
    %vm23 = vweird.f32 %v17
    %vm24 = vweird.f32 %v18
    %vm25 = vmor %vm23, %vm24
    %v26 = vsel %vm25, %v18, %v22
    %v27 = vand.u32 2147483647, %v17
    %vm28 = vcmp.eq.f32.partialorder %v27, 8.507059e+37
    %v29 = vand.u32 %v17, 2147483648
    %v30 = vor.u32 1.1754944e-38, %v29
    %v31 = vsel %vm28, %v30, %v26
    %v32 = vmul.f32 1.0, %v31
    %v33 = vmax.f32 %v32, 1e-05
    %v34 = vmin.f32 %v33, 0.99999
    %v35 = vsub.f32 1.0, %v34
    %v36 = vsub.f32 1.0, %v11
    %v37 = vlaneseq
    %v38 = vshrl.u32 %v37, 7
    %v39 = vlaneseq
    %v40 = vand.u32 %v39, 127
    %v41 = vmul.u32 %v38, 128
    %v42 = vadd.s32 %v41, %v40
    %vm43 = vcmp.lt.s32.totalorder %v42, 200
    %v44 = vsel %vm43, 1, 0
    %v45 = vcvt.s32.f32 %v44
    %v46 = vmul.f32 %v13, %v11
    %v47 = vmul.f32 %v13, %v36
    %v48 = vmul.f32 %v45, %v36
    %v49 = vmul.f32 %v46, %v35
    %v50 = vmul.f32 %v11, %v35
    %v51 = vmul.f32 %v47, %v34
    %v52 = vmul.f32 %v48, %v34
    %53 = vadd.xlane.f32.xlu0 %v49
    %v54 = vpop.xlane.xlu0 %53
    %55 = vadd.xlane.f32.xlu0 %v50
    %v56 = vpop.xlane.xlu0 %55
    %57 = vadd.xlane.f32.xlu0 %v51
    %v58 = vpop.xlane.xlu0 %57
    %59 = vadd.xlane.f32.xlu0 %v52
    %v60 = vpop.xlane.xlu0 %59
    %61 = vadd.xlane.f32.xlu0 %v46
    %v62 = vpop.xlane.xlu0 %61
    %63 = vadd.xlane.f32.xlu0 %v11
    %v64 = vpop.xlane.xlu0 %63
    %65 = vadd.xlane.f32.xlu0 %v47
    %v66 = vpop.xlane.xlu0 %65
    %67 = vadd.xlane.f32.xlu0 %v48
    %v68 = vpop.xlane.xlu0 %67
    %v77 = vperm.slane %v54, %v40
    %v78 = vperm.slane %v56, %v40
    %v79 = vperm.slane %v58, %v40
    %v80 = vperm.slane %v60, %v40
    %v81 = vperm.slane %v62, %v40
    %v82 = vperm.slane %v64, %v40
    %v83 = vperm.slane %v66, %v40
    %v84 = vperm.slane %v68, %v40
    %vm85 = vcmask 1041409
    %v86 = vsel %vm85, %v78, %v77
    %vm87 = vcmask 1042434
    %v88 = vsel %vm87, %v79, %v86
    %vm89 = vcmask 1043459
    %v90 = vsel %vm89, %v80, %v88
    %vm91 = vcmask 1044484
    %v92 = vsel %vm91, %v81, %v90
    %vm93 = vcmask 1045509
    %v94 = vsel %vm93, %v82, %v92
    %vm95 = vcmask 1046534
    %v96 = vsel %vm95, %v83, %v94
    %vm97 = vcmask 1047559
    %v98 = vsel %vm97, %v84, %v96
    %vm100 = vcmask 64512
    %v101 = vsel %vm100, %v98, 0.0
    %102 = vadd.xlane.f32.xlu0 %v101
    %v103 = vpop.xlane.xlu0 %102
    %s104 = vtos %v103
    %v105 = vrot.slane %v103, 4
    %s106 = vtos %v105
    %v107 = vstv %s106
    %v108 = vrcp.pop %v107
    %v109 = vmul.f32 %v107, %v108
    %v110 = vsub.f32 1.0, %v109
    %v111 = vmul.f32 %v108, %v110
    %v112 = vadd.f32 %v108, %v111
    %vm113 = vweird.f32 %v107
    %vm114 = vweird.f32 %v108
    %vm115 = vmor %vm113, %vm114
    %v116 = vsel %vm115, %v108, %v112
    %v117 = vand.u32 2147483647, %v107
    %vm118 = vcmp.eq.f32.partialorder %v117, 8.507059e+37
    %v119 = vand.u32 %v107, 2147483648
    %v120 = vor.u32 1.1754944e-38, %v119
    %v121 = vsel %vm118, %v120, %v116
    %s122 = vtos %v121
    %s123 = smul.f32 %s104, %s122
    %v124 = vrot.slane %v103, 1
    %s125 = vtos %v124
    %s126 = ssub.f32 %s125, %s104
    %v127 = vrot.slane %v103, 5
    %s128 = vtos %v127
    %s129 = ssub.f32 %s128, %s106
    %v130 = vstv %s129
    %v131 = vrcp.pop %v130
    %v132 = vmul.f32 %v130, %v131
    %v133 = vsub.f32 1.0, %v132
    %v134 = vmul.f32 %v131, %v133
    %v135 = vadd.f32 %v131, %v134
    %vm136 = vweird.f32 %v130
    %vm137 = vweird.f32 %v131
    %vm138 = vmor %vm136, %vm137
    %v139 = vsel %vm138, %v131, %v135
    %v140 = vand.u32 2147483647, %v130
    %vm141 = vcmp.eq.f32.partialorder %v140, 8.507059e+37
    %v142 = vand.u32 %v130, 2147483648
    %v143 = vor.u32 1.1754944e-38, %v142
    %v144 = vsel %vm141, %v143, %v139
    %s145 = vtos %v144
    %s146 = smul.f32 %s126, %s145
    %v147 = vrot.slane %v103, 2
    %s148 = vtos %v147
    %v149 = vrot.slane %v103, 6
    %s150 = vtos %v149
    %v151 = vstv %s150
    %v152 = vrcp.pop %v151
    %v153 = vmul.f32 %v151, %v152
    %v154 = vsub.f32 1.0, %v153
    %v155 = vmul.f32 %v152, %v154
    %v156 = vadd.f32 %v152, %v155
    %vm157 = vweird.f32 %v151
    %vm158 = vweird.f32 %v152
    %vm159 = vmor %vm157, %vm158
    %v160 = vsel %vm159, %v152, %v156
    %v161 = vand.u32 2147483647, %v151
    %vm162 = vcmp.eq.f32.partialorder %v161, 8.507059e+37
    %v163 = vand.u32 %v151, 2147483648
    %v164 = vor.u32 1.1754944e-38, %v163
    %v165 = vsel %vm162, %v164, %v160
    %s166 = vtos %v165
    %s167 = smul.f32 %s148, %s166
    %v168 = vrot.slane %v103, 3
    %s169 = vtos %v168
    %s170 = ssub.f32 %s169, %s148
    %v171 = vrot.slane %v103, 7
    %s172 = vtos %v171
    %s173 = ssub.f32 %s172, %s150
    %v174 = vstv %s173
    %v175 = vrcp.pop %v174
    %v176 = vmul.f32 %v174, %v175
    %v177 = vsub.f32 1.0, %v176
    %v178 = vmul.f32 %v175, %v177
    %v179 = vadd.f32 %v175, %v178
    %vm180 = vweird.f32 %v174
    %vm181 = vweird.f32 %v175
    %vm182 = vmor %vm180, %vm181
    %v183 = vsel %vm182, %v175, %v179
    %v184 = vand.u32 2147483647, %v174
    %vm185 = vcmp.eq.f32.partialorder %v184, 8.507059e+37
    %v186 = vand.u32 %v174, 2147483648
    %v187 = vor.u32 1.1754944e-38, %v186
    %v188 = vsel %vm185, %v187, %v183
    %s189 = vtos %v188
    %s190 = smul.f32 %s170, %s189
    %s191 = ssub.f32 %s123, %s146
    %s192 = sand.u32 2147483647, %s191
    %s193 = ssub.f32 %s167, %s190
    %s194 = sand.u32 2147483647, %s193
    %s195 = smax.f32 %s192, %s194
    %s196 = sand.u32 2147483647, %s195
    %s197 = ssub.f32 0.0, %s196
    %s198 = scalar_lea.smem [#allocation2], 0
    %199 = sst [smem:[%s198]] %s197
    // Predicated region
    $region6: #{disparate_impact_maximizer_loss.1} parent=1 // pred_check
      _
    $region7: #{disparate_impact_maximizer_loss.1} parent=1 // pred_check_branch
      %201 = sbr.rel (0) target = $region9
    $region8: #{disparate_impact_maximizer_loss.1} parent=1 // pred_region
      %203 = vsyncadd [#allocation3], 0
      %s205 = sshll.u32 %s1, 4
      %s206 = int_to_ptr.hbm [resolvable:$true] %s205
      %208 = dma.smem_to_hbm [#allocation2], 16, %s206, [#allocation3]
    $region9: #{disparate_impact_maximizer_loss.1} parent=1 // pred_fallthru
      _
    // Predicated region
    $region10: #{disparate_impact_maximizer_loss.1} parent=1 // pred_check
      _
    $region11: #{disparate_impact_maximizer_loss.1} parent=1 // pred_check_branch
      %210 = sbr.rel (0) target = $region13
    $region12: #{disparate_impact_maximizer_loss.1} parent=1 // pred_region
      %212 = dma.done [#allocation3], 16
    $region13: #{disparate_impact_maximizer_loss.1} parent=1 // pred_fallthru
      _
    %213 = sfence
    %214 = vsyncpa [#allocation3], 1

</llo_original>
